<compile_context>
chip_gen: v7x
topology: tpu7x:2x2x1
jax: 0.10.0
libtpu: 0.0.40
codegen_flags: <defaults>
</compile_context>

<pallas_src>
import jax
import jax.numpy as jnp
from jax.experimental import pallas as pl
from jax.experimental.pallas import tpu as pltpu


_SUBLANE = 8
_MAX_TILE_C = 4096                      # stream the class axis beyond this (multiple of 128)
_BLOCK_BUDGET_BYTES = 2 * 1024 * 1024   # per logits block (double-buffering doubles it)
_VMEM_LIMIT_BYTES = 32 * 1024 * 1024    # safe on v5e / v6e / v7x


def _round_up(x, m):
    return ((x + m - 1) // m) * m


def _choose_tiles(n, c, itemsize):
    """Pick (TILE_N, N_pad, TILE_C, C_pad) so one logits block stays small."""
    if c <= _MAX_TILE_C:
        tile_c, c_pad = c, c                      # full class axis per block
    else:
        tile_c = _MAX_TILE_C                      # multiple of 128
        c_pad = _round_up(c, tile_c)
    tile_n = (_BLOCK_BUDGET_BYTES // max(1, tile_c * itemsize)) // _SUBLANE * _SUBLANE
    tile_n = max(_SUBLANE, min(tile_n, 512, _round_up(n, _SUBLANE)))
    n_pad = _round_up(n, tile_n)
    return tile_n, n_pad, tile_c, c_pad


def _ce_rows_kernel(logits_ref, labels_ref, out_ref, m_sc, s_sc, p_sc):
    """One (model, row-tile, class-tile) grid step of streamed cross-entropy.

    logits_ref: (1, TILE_N, TILE_C)  input dtype
    labels_ref: (TILE_N, 1)          int32 class index per row
    out_ref:    (1, TILE_N, 1)       f32, written at the last class step
    m_sc/s_sc/p_sc: (TILE_N, 1) f32 scratch: running max / sum-exp / picked.
    """
    kc = pl.program_id(2)

    @pl.when(kc == 0)
    def _init():
        m_sc[...] = jnp.full_like(m_sc, -jnp.inf)
        s_sc[...] = jnp.zeros_like(s_sc)
        p_sc[...] = jnp.zeros_like(p_sc)

    logits = logits_ref[0]                       # (TILE_N, TILE_C), input dtype
    labels = labels_ref[...]                     # (TILE_N, 1) int32
    tn, tc = logits.shape

    # Gather logits[i, labels[i]] for labels falling inside this class tile.
    cls = jax.lax.broadcasted_iota(jnp.int32, (tn, tc), 1) + kc * tc
    hit = cls == labels
    picked = jnp.where(hit, logits, jnp.zeros_like(logits)).astype(jnp.float32)
    p_sc[...] += jnp.sum(picked, axis=-1, keepdims=True)

    # Online (streaming) logsumexp over the class axis; f32 accumulators.
    blk_max = jnp.max(logits, axis=-1, keepdims=True).astype(jnp.float32)
    m_new = jnp.maximum(m_sc[...], blk_max)
    p = jnp.exp(logits.astype(jnp.float32) - m_new)
    s_sc[...] = s_sc[...] * jnp.exp(m_sc[...] - m_new) + jnp.sum(p, axis=-1, keepdims=True)
    m_sc[...] = m_new

    @pl.when(kc == pl.num_programs(2) - 1)
    def _finalize():
        # per-row loss = logsumexp(logits) - logits[label]
        out_ref[0] = m_sc[...] + jnp.log(s_sc[...]) - p_sc[...]


@jax.jit
def batched_cross_entropy(logits, labels):
    """Mean softmax cross-entropy per prediction.

    logits: (M, N, C) float; labels: (N,) int  ->  (M,) f32 losses.
    """
    m, n, c = logits.shape
    itemsize = jnp.dtype(logits.dtype).itemsize
    tile_n, n_pad, tile_c, c_pad = _choose_tiles(n, c, itemsize)

    # Pad the class axis with a huge negative (exp -> 0, never matches a label)
    # and the row axis with zeros (dropped before the mean).
    if c_pad != c:
        neg = jnp.asarray(jnp.finfo(logits.dtype).min, logits.dtype)
        logits = jnp.pad(logits, ((0, 0), (0, 0), (0, c_pad - c)), constant_values=neg)
    if n_pad != n:
        logits = jnp.pad(logits, ((0, 0), (0, n_pad - n), (0, 0)))
    labels2d = labels.astype(jnp.int32).reshape(n, 1)
    if n_pad != n:
        labels2d = jnp.pad(labels2d, ((0, n_pad - n), (0, 0)))

    grid = (m, n_pad // tile_n, c_pad // tile_c)

    per_row = pl.pallas_call(
        _ce_rows_kernel,
        out_shape=jax.ShapeDtypeStruct((m, n_pad, 1), jnp.float32),
        grid_spec=pltpu.PrefetchScalarGridSpec(
            num_scalar_prefetch=0,
            grid=grid,
            in_specs=[
                pl.BlockSpec((1, tile_n, tile_c), lambda mi, ri, ci: (mi, ri, ci)),
                pl.BlockSpec((tile_n, 1), lambda mi, ri, ci: (ri, 0)),
            ],
            out_specs=pl.BlockSpec((1, tile_n, 1), lambda mi, ri, ci: (mi, ri, 0)),
            scratch_shapes=[pltpu.VMEM((tile_n, 1), jnp.float32)] * 3,
        ),
        compiler_params=pltpu.CompilerParams(
            dimension_semantics=("parallel", "parallel", "arbitrary"),
            vmem_limit_bytes=_VMEM_LIMIT_BYTES,
        ),
        cost_estimate=pl.CostEstimate(
            flops=5 * m * n_pad * c_pad,
            transcendentals=m * n_pad * c_pad,
            bytes_accessed=m * n_pad * c_pad * itemsize + n_pad * 4 + m * n_pad * 4,
        ),
    )(logits, labels2d)

    # Masked mean over the true N rows (divisor is the global N).
    return jnp.mean(per_row[:, :n, 0], axis=1)


class NormalLossPallas:
    """JAX/Pallas port of Normal_Loss with the default CrossEntropyLoss module."""

    def __init__(self, pretrain_mode=False, loss_module="CrossEntropyLoss"):
        if loss_module != "CrossEntropyLoss":
            raise NotImplementedError("Only CrossEntropyLoss is implemented in Pallas.")
        self.pretrain = pretrain_mode

    def __call__(self, preds, labels):
        if self.pretrain:
            return batched_cross_entropy(preds[None], labels)[0]
        # Fuse the prediction list into a single pallas_call when shapes/dtypes agree.
        sigs = {(tuple(p.shape), jnp.dtype(p.dtype).name) for p in preds}
        if len(sigs) == 1:
            losses = batched_cross_entropy(jnp.stack(preds), labels)
            return [losses[i] for i in range(len(preds))]
        return [batched_cross_entropy(p[None], labels)[0] for p in preds]


def _reference_ce(logits, labels):
    logits = logits.astype(jnp.float32)
    lse = jax.scipy.special.logsumexp(logits, axis=-1)
    picked = jnp.take_along_axis(logits, labels[:, None].astype(jnp.int32), axis=-1)[:, 0]
    return jnp.mean(lse - picked)


if __name__ == "__main__":
    key = jax.random.PRNGKey(0)
    n_models = 3          # number of model predictions in the list (non-pretrain mode)
    batch = 8
    num_classes = 32

    keys = jax.random.split(key, n_models + 1)
    preds = [jax.random.normal(keys[i], (batch, num_classes), dtype=jnp.float32)
             for i in range(n_models)]
    labels = jax.random.randint(keys[-1], (batch,), 0, num_classes, dtype=jnp.int32)

    # Non-pretrain mode: list of losses (single fused pallas_call under the hood).
    loss_fn = NormalLossPallas(pretrain_mode=False)
    losses = [jax.block_until_ready(l) for l in loss_fn(preds, labels)]

    # Pretrain mode: single scalar loss.
    pre_loss_fn = NormalLossPallas(pretrain_mode=True)
    pre_loss = jax.block_until_ready(pre_loss_fn(preds[0], labels))

    # Sanity-check against a pure-JAX reference.
    for p, l in zip(preds, losses):
        ref = _reference_ce(p, labels)
        assert jnp.allclose(l, ref, atol=1e-5, rtol=1e-5), (l, ref)
    assert jnp.allclose(pre_loss, _reference_ce(preds[0], labels), atol=1e-5, rtol=1e-5)

    # Extra coverage: ragged batch (row padding/masking path).
    k2 = jax.random.split(jax.random.PRNGKey(1), 3)
    big = jax.random.normal(k2[0], (2, 50, 130), dtype=jnp.float32)
    big_labels = jax.random.randint(k2[1], (50,), 0, 130, dtype=jnp.int32)
    big_losses = jax.block_until_ready(batched_cross_entropy(big, big_labels))
    for mi in range(2):
        ref = _reference_ce(big[mi], big_labels)
        assert jnp.allclose(big_losses[mi], ref, atol=1e-5, rtol=1e-5), (big_losses[mi], ref)

    # Extra coverage: streamed class axis (C > TILE_C, class padding path).
    wide = jax.random.normal(k2[2], (1, 16, 5000), dtype=jnp.float32)
    wide_labels = jax.random.randint(jax.random.PRNGKey(2), (16,), 0, 5000, dtype=jnp.int32)
    wide_loss = jax.block_until_ready(batched_cross_entropy(wide, wide_labels))
    ref = _reference_ce(wide[0], wide_labels)
    assert jnp.allclose(wide_loss[0], ref, atol=1e-4, rtol=1e-4), (wide_loss[0], ref)

    print("KERNEL_OK")
</pallas_src>

<mosaic_0001>
module attributes {stable_mosaic.version = 11 : i64} {
  func.func @_ce_rows_kernel(%arg0: i32, %arg1: i32, %arg2: i32, %arg3: memref<1x8x32xf32, #tpu.memory_space<vmem>>, %arg4: memref<8x1xi32, #tpu.memory_space<vmem>>, %arg5: memref<1x8x1xf32, #tpu.memory_space<vmem>>, %arg6: memref<8x1xf32, #tpu.memory_space<vmem>>, %arg7: memref<8x1xf32, #tpu.memory_space<vmem>>, %arg8: memref<8x1xf32, #tpu.memory_space<vmem>>) attributes {dimension_semantics = [#tpu.dimension_semantics<parallel>, #tpu.dimension_semantics<parallel>, #tpu.dimension_semantics<arbitrary>], iteration_bounds = array<i64: 3, 1, 1>, scalar_prefetch = 0 : i64, scratch_operands = 3 : i64, tpu.core_type = #tpu.core_type<tc>, window_params = [{transform_indices = @transform_0, window_bounds = array<i64: 1, 8, 32>}, {transform_indices = @transform_1, window_bounds = array<i64: 8, 1>}, {transform_indices = @transform_2, window_bounds = array<i64: 1, 8, 1>}]} {
    %c0_i32 = arith.constant 0 : i32
    %0 = arith.cmpi eq, %arg2, %c0_i32 : i32
    %1 = arith.extui %0 : i1 to i32
    %c0_i32_0 = arith.constant 0 : i32
    %2 = arith.cmpi ne, %1, %c0_i32_0 : i32
    scf.if %2 {
      %cst_24 = arith.constant 0xFF800000 : f32
      %39 = vector.broadcast %cst_24 : f32 to vector<8x1xf32>
      %c0_25 = arith.constant 0 : index
      %c0_26 = arith.constant 0 : index
      %40 = vector.load %arg6[%c0_25, %c0_26] : memref<8x1xf32, #tpu.memory_space<vmem>>, vector<8x1xf32>
      tpu.vector_store %arg6[%c0_25, %c0_26], %39 {strides = array<i32>} : memref<8x1xf32, #tpu.memory_space<vmem>>, vector<8x1xf32>,
      %cst_27 = arith.constant 0.000000e+00 : f32
      %41 = vector.broadcast %cst_27 : f32 to vector<8x1xf32>
      %c0_28 = arith.constant 0 : index
      %c0_29 = arith.constant 0 : index
      %42 = vector.load %arg7[%c0_28, %c0_29] : memref<8x1xf32, #tpu.memory_space<vmem>>, vector<8x1xf32>
      tpu.vector_store %arg7[%c0_28, %c0_29], %41 {strides = array<i32>} : memref<8x1xf32, #tpu.memory_space<vmem>>, vector<8x1xf32>,
      %cst_30 = arith.constant 0.000000e+00 : f32
      %43 = vector.broadcast %cst_30 : f32 to vector<8x1xf32>
      %c0_31 = arith.constant 0 : index
      %c0_32 = arith.constant 0 : index
      %44 = vector.load %arg8[%c0_31, %c0_32] : memref<8x1xf32, #tpu.memory_space<vmem>>, vector<8x1xf32>
      tpu.vector_store %arg8[%c0_31, %c0_32], %43 {strides = array<i32>} : memref<8x1xf32, #tpu.memory_space<vmem>>, vector<8x1xf32>,
    } else {
    }
    %c0 = arith.constant 0 : index
    %c0_1 = arith.constant 0 : index
    %c0_2 = arith.constant 0 : index
    %3 = vector.load %arg3[%c0, %c0_1, %c0_2] : memref<1x8x32xf32, #tpu.memory_space<vmem>>, vector<1x8x32xf32>
    %4 = vector.shape_cast %3 : vector<1x8x32xf32> to vector<8x32xf32>
    %c0_3 = arith.constant 0 : index
    %c0_4 = arith.constant 0 : index
    %5 = vector.load %arg4[%c0_3, %c0_4] : memref<8x1xi32, #tpu.memory_space<vmem>>, vector<8x1xi32>
    %6 = tpu.iota {dimensions = array<i32: 1>} : vector<8x32xi32>
    %c32_i32 = arith.constant 32 : i32
    %7 = arith.muli %arg2, %c32_i32 : i32
    %8 = vector.broadcast %7 : i32 to vector<8x32xi32>
    %9 = arith.addi %6, %8 : vector<8x32xi32>
    %10 = vector.broadcast %5 : vector<8x1xi32> to vector<8x32xi32>
    %11 = arith.cmpi eq, %9, %10 : vector<8x32xi32>
    %cst = arith.constant 0.000000e+00 : f32
    %12 = vector.broadcast %cst : f32 to vector<8x32xf32>
    %13 = arith.select %11, %4, %12 : vector<8x32xi1>, vector<8x32xf32>
    %c0_5 = arith.constant 0 : index
    %c0_6 = arith.constant 0 : index
    %14 = vector.load %arg8[%c0_5, %c0_6] : memref<8x1xf32, #tpu.memory_space<vmem>>, vector<8x1xf32>
    %cst_7 = arith.constant dense<0.000000e+00> : vector<8xf32>
    %15 = vector.multi_reduction <add>, %13, %cst_7 [1] : vector<8x32xf32> to vector<8xf32>
    %16 = vector.shape_cast %15 : vector<8xf32> to vector<8x1xf32>
    %17 = arith.addf %14, %16 : vector<8x1xf32>
    %c0_8 = arith.constant 0 : index
    %c0_9 = arith.constant 0 : index
    %18 = vector.load %arg8[%c0_8, %c0_9] : memref<8x1xf32, #tpu.memory_space<vmem>>, vector<8x1xf32>
    tpu.vector_store %arg8[%c0_8, %c0_9], %17 {strides = array<i32>} : memref<8x1xf32, #tpu.memory_space<vmem>>, vector<8x1xf32>,
    %cst_10 = arith.constant dense<0xFF800000> : vector<8xf32>
    %19 = vector.multi_reduction <maximumf>, %4, %cst_10 [1] : vector<8x32xf32> to vector<8xf32>
    %20 = vector.shape_cast %19 : vector<8xf32> to vector<8x1xf32>
    %c0_11 = arith.constant 0 : index
    %c0_12 = arith.constant 0 : index
    %21 = vector.load %arg6[%c0_11, %c0_12] : memref<8x1xf32, #tpu.memory_space<vmem>>, vector<8x1xf32>
    %22 = arith.maximumf %21, %20 : vector<8x1xf32>
    %23 = vector.broadcast %22 : vector<8x1xf32> to vector<8x32xf32>
    %24 = arith.subf %4, %23 : vector<8x32xf32>
    %25 = math.exp %24 : vector<8x32xf32>
    %c0_13 = arith.constant 0 : index
    %c0_14 = arith.constant 0 : index
    %26 = vector.load %arg7[%c0_13, %c0_14] : memref<8x1xf32, #tpu.memory_space<vmem>>, vector<8x1xf32>
    %c0_15 = arith.constant 0 : index
    %c0_16 = arith.constant 0 : index
    %27 = vector.load %arg6[%c0_15, %c0_16] : memref<8x1xf32, #tpu.memory_space<vmem>>, vector<8x1xf32>
    %28 = arith.subf %27, %22 : vector<8x1xf32>
    %29 = math.exp %28 : vector<8x1xf32>
    %30 = arith.mulf %26, %29 : vector<8x1xf32>
    %cst_17 = arith.constant dense<0.000000e+00> : vector<8xf32>
    %31 = vector.multi_reduction <add>, %25, %cst_17 [1] : vector<8x32xf32> to vector<8xf32>
    %32 = vector.shape_cast %31 : vector<8xf32> to vector<8x1xf32>
    %33 = arith.addf %30, %32 : vector<8x1xf32>
    %c0_18 = arith.constant 0 : index
    %c0_19 = arith.constant 0 : index
    %34 = vector.load %arg7[%c0_18, %c0_19] : memref<8x1xf32, #tpu.memory_space<vmem>>, vector<8x1xf32>
    tpu.vector_store %arg7[%c0_18, %c0_19], %33 {strides = array<i32>} : memref<8x1xf32, #tpu.memory_space<vmem>>, vector<8x1xf32>,
    %c0_20 = arith.constant 0 : index
    %c0_21 = arith.constant 0 : index
    %35 = vector.load %arg6[%c0_20, %c0_21] : memref<8x1xf32, #tpu.memory_space<vmem>>, vector<8x1xf32>
    tpu.vector_store %arg6[%c0_20, %c0_21], %22 {strides = array<i32>} : memref<8x1xf32, #tpu.memory_space<vmem>>, vector<8x1xf32>,
    %c0_i32_22 = arith.constant 0 : i32
    %36 = arith.cmpi eq, %arg2, %c0_i32_22 : i32
    %37 = arith.extui %36 : i1 to i32
    %c0_i32_23 = arith.constant 0 : i32
    %38 = arith.cmpi ne, %37, %c0_i32_23 : i32
    scf.if %38 {
      %c0_24 = arith.constant 0 : index
      %c0_25 = arith.constant 0 : index
      %39 = vector.load %arg6[%c0_24, %c0_25] : memref<8x1xf32, #tpu.memory_space<vmem>>, vector<8x1xf32>
      %c0_26 = arith.constant 0 : index
      %c0_27 = arith.constant 0 : index
      %40 = vector.load %arg7[%c0_26, %c0_27] : memref<8x1xf32, #tpu.memory_space<vmem>>, vector<8x1xf32>
      %41 = math.log %40 : vector<8x1xf32>
      %42 = arith.addf %39, %41 : vector<8x1xf32>
      %c0_28 = arith.constant 0 : index
      %c0_29 = arith.constant 0 : index
      %43 = vector.load %arg8[%c0_28, %c0_29] : memref<8x1xf32, #tpu.memory_space<vmem>>, vector<8x1xf32>
      %44 = arith.subf %42, %43 : vector<8x1xf32>
      %c0_30 = arith.constant 0 : index
      %c0_31 = arith.constant 0 : index
      %c0_32 = arith.constant 0 : index
      %45 = vector.load %arg5[%c0_30, %c0_31, %c0_32] : memref<1x8x1xf32, #tpu.memory_space<vmem>>, vector<1x8x1xf32>
      %46 = vector.shape_cast %45 : vector<1x8x1xf32> to vector<8x1xf32>
      %47 = vector.shape_cast %44 : vector<8x1xf32> to vector<1x8x1xf32>
      tpu.vector_store %arg5[%c0_30, %c0_31, %c0_32], %47 {strides = array<i32>} : memref<1x8x1xf32, #tpu.memory_space<vmem>>, vector<1x8x1xf32>,
    } else {
    }
    return
  }
  func.func @transform_0(%arg0: i32, %arg1: i32, %arg2: i32) -> (i32, i32, i32) {
    %c0_i32 = arith.constant 0 : i32
    return %arg0, %arg1, %arg2 : i32, i32, i32
  }
  func.func @transform_1(%arg0: i32, %arg1: i32, %arg2: i32) -> (i32, i32) {
    %c0_i32 = arith.constant 0 : i32
    %c0_i32_0 = arith.constant 0 : i32
    return %arg1, %c0_i32 : i32, i32
  }
  func.func @transform_2(%arg0: i32, %arg1: i32, %arg2: i32) -> (i32, i32, i32) {
    %c0_i32 = arith.constant 0 : i32
    %c0_i32_0 = arith.constant 0 : i32
    return %arg0, %arg1, %c0_i32 : i32, i32, i32
  }
}

</mosaic_0001>

<llo_original>
// kernel: batched_cross_entropy.1
$region0: #{batched_cross_entropy.1}
  #allocation0 [shape = 'u32[]', space=smem, size = 0x4, offset = 0x4, fixed_abs, tag = 'smem constant byte address 0x4 - core index']
  #allocation1 [shape = 'u32[144,128]{1,0:T(1,128)}', space=vmem, size = 0x12000, scoped, tag = 'internal scratch']
  #allocation2 [shape = 'f32[8,1]{1,0:T(8,128)}', space=vmem, size = 0x1000, scoped, tag = 'scratch operand']
  #allocation3 [shape = 'f32[8,1]{1,0:T(8,128)}', space=vmem, size = 0x1000, scoped, tag = 'scratch operand']
  #allocation4 [shape = 'f32[8,1]{1,0:T(8,128)}', space=vmem, size = 0x1000, scoped, tag = 'scratch operand']
  %s0 = inlined_call_operand.hbm [shape: f32[3,8,32], index: 0, kind: input, shape index: {}]
  %s1 = inlined_call_operand.vmem [shape: s32[8,1], index: 1, kind: input, shape index: {}]
  %s2 = inlined_call_operand.vmem [shape: f32[3,8,1], index: 2, kind: output, shape index: {}]
  %s3 = sld [smem:[#allocation0]]
  $region53: #{batched_cross_entropy.1} parent=0
    _
  %s5 = ssub.s32 1, %s3
  %s6 = scalar_select 0, %s5, %s3
  $region1: #{batched_cross_entropy.1} parent=0
    #allocation5 [shape = 'u8[8192]{0}', space=vmem, size = 0x2000, scoped, tag = 'input window, operand 0']
    #allocation6 [shape = 's32[2]{0}', space=sflag, size = 0x8, scoped, tag = 'scoped memory for batched_cross_entropy.1']
    %7 = vsyncpa [#allocation6], 0
    %s8 = scalar_lea.sflag [#allocation6], 1
    %9 = vsyncpa %s8, 0
    loop: start=0, step=1, limit=5
    $region2: #{batched_cross_entropy.1} parent=1 // loop_pre_header
      _
    $region3: #{batched_cross_entropy.1} parent=1 // loop_header
      %s11 = sphi 0, %s15
      %p12 = scmp.ge.s32.totalorder %s11, 5
      %s18 = sphi 0, %s37
      %s19 = sphi 0, %s33
      %s20 = sphi 0, %s29
      %s21 = sphi 0, %s18
      %s22 = sphi 0, %s19
      %s23 = sphi 0, %s20
      %s24 = sphi 0, %s21
      %s25 = sphi 0, %s22
      %s26 = sphi 0, %s23
      %s44 = sphi 0, %s46
      %s47 = sphi 0, %s44
      %s48 = sphi 0, %s47
      %s64 = sphi 0, %s48
      %s70 = sphi 0, %s72
      %s73 = sphi 0, %s70
      %s74 = sphi 0, %s73
      %s90 = sphi 0, %s74
      %s98 = sphi 0, %s100
      %s101 = sphi 0, %s98
      %s102 = sphi 0, %s101
      %s118 = sphi 0, %s102
    $region4: #{batched_cross_entropy.1} parent=1 // loop_header_branch
      %14 = sbr.rel (%p12) target = $region8
    $region5: #{batched_cross_entropy.1} parent=1 // loop_body
      %s16 = ssub.s32 %s11, 1
      %s17 = ssub.s32 %s11, 2
      %s27 = sadd.s32 1, %s20
      %p28 = scmp.ge.s32.totalorder %s27, 1
      %s29 = scalar_select %p28, 0, %s27
      %s30 = sadd.s32 1, %s19
      %s31 = scalar_select %p28, %s30, %s19
      %p32 = scmp.ge.s32.totalorder %s31, 1
      %s33 = scalar_select %p32, 0, %s31
      %s34 = sadd.s32 1, %s18
      %s35 = scalar_select %p32, %s34, %s18
      %p36 = scmp.ge.s32.totalorder %s35, 3
      %s37 = scalar_select %p36, 0, %s35
      %s38 = ssub.s32 %s18, %s37
      %s39 = ssub.s32 %s19, %s33
      %s40 = sor.u32 %s38, %s39
      %s41 = ssub.s32 %s20, %s29
      %s42 = sor.u32 %s40, %s41
      %p43 = scmp.eq.s32.totalorder %s42, 0
      %s45 = sadd.s32 %s44, 1
      %s46 = scalar_select %p43, %s44, %s45
      %p49 = pneg %p43
      %p50 = scmp.eq.s32.totalorder %s11, 2
      %p51 = por %p49, %p50
      %p52 = scmp.ne.s32.totalorder %s44, %s47
      %p53 = scmp.eq.s32.totalorder %s11, 0
      %p54 = por %p52, %p53
      %p55 = scmp.ne.s32.totalorder %s44, %s47
      %p56 = scmp.eq.s32.totalorder %s16, 2
      %p57 = por %p55, %p56
      %p58 = scmp.ne.s32.totalorder %s47, %s48
      %p59 = scmp.eq.s32.totalorder %s16, 0
      %p60 = por %p58, %p59
      %p61 = scmp.ne.s32.totalorder %s47, %s48
      %p62 = scmp.eq.s32.totalorder %s17, 2
      %p63 = por %p61, %p62
      %p65 = scmp.ne.s32.totalorder %s48, %s64
      %p66 = scmp.eq.s32.totalorder %s17, 0
      %p67 = por %p65, %p66
      %s68 = ssub.s32 %s19, %s33
      %p69 = scmp.eq.s32.totalorder %s68, 0
      %s71 = sadd.s32 %s70, 1
      %s72 = scalar_select %p69, %s70, %s71
      %p75 = pneg %p69
      %p76 = scmp.eq.s32.totalorder %s11, 2
      %p77 = por %p75, %p76
      %p78 = scmp.ne.s32.totalorder %s70, %s73
      %p79 = scmp.eq.s32.totalorder %s11, 0
      %p80 = por %p78, %p79
      %p81 = scmp.ne.s32.totalorder %s70, %s73
      %p82 = scmp.eq.s32.totalorder %s16, 2
      %p83 = por %p81, %p82
      %p84 = scmp.ne.s32.totalorder %s73, %s74
      %p85 = scmp.eq.s32.totalorder %s16, 0
      %p86 = por %p84, %p85
      %p87 = scmp.ne.s32.totalorder %s73, %s74
      %p88 = scmp.eq.s32.totalorder %s17, 2
      %p89 = por %p87, %p88
      %p91 = scmp.ne.s32.totalorder %s74, %s90
      %p92 = scmp.eq.s32.totalorder %s17, 0
      %p93 = por %p91, %p92
      %s94 = ssub.s32 %s18, %s37
      %s95 = ssub.s32 %s19, %s33
      %s96 = sor.u32 %s94, %s95
      %p97 = scmp.eq.s32.totalorder %s96, 0
      %s99 = sadd.s32 %s98, 1
      %s100 = scalar_select %p97, %s98, %s99
      %p103 = pneg %p97
      %p104 = scmp.eq.s32.totalorder %s11, 2
      %p105 = por %p103, %p104
      %p106 = scmp.ne.s32.totalorder %s98, %s101
      %p107 = scmp.eq.s32.totalorder %s11, 0
      %p108 = por %p106, %p107
      %p109 = scmp.ne.s32.totalorder %s98, %s101
      %p110 = scmp.eq.s32.totalorder %s16, 2
      %p111 = por %p109, %p110
      %p112 = scmp.ne.s32.totalorder %s101, %s102
      %p113 = scmp.eq.s32.totalorder %s16, 0
      %p114 = por %p112, %p113
      %p115 = scmp.ne.s32.totalorder %s101, %s102
      %p116 = scmp.eq.s32.totalorder %s17, 2
      %p117 = por %p115, %p116
      %p119 = scmp.ne.s32.totalorder %s102, %s118
      %p120 = scmp.eq.s32.totalorder %s17, 0
      %p121 = por %p119, %p120
      %p122 = scmp.le.s32.totalorder 1, %s11
      %p123 = scmp.lt.s32.totalorder %s11, 4
      %p124 = pnand %p122, %p123
      %p125 = pneg %p124
      // Predicated region
      $region9: #{batched_cross_entropy.1} parent=5 // pred_check
        _
      $region10: #{batched_cross_entropy.1} parent=5 // pred_check_branch
        %127 = sbr.rel (%p124) target = $region12
      $region11: #{batched_cross_entropy.1} parent=5 // pred_region
        %s128 = ssub.s32 %s11, 1
        // Predicated region
        $region13: #{batched_cross_entropy.1} parent=11 // pred_check
          %p129 = pneg %p86
        $region14: #{batched_cross_entropy.1} parent=11 // pred_check_branch
          %131 = sbr.rel (%p129) target = $region16
        $region15: #{batched_cross_entropy.1} parent=11 // pred_region
          %p132 = scmp.lt.s32.totalorder %s22, 0
          %s133 = scalar_select %p132, %s22, 0
          %s134 = smul.addr %s133, 8
          %s135 = scalar_lea.vmem %s1, %s134
        $region16: #{batched_cross_entropy.1} parent=11 // pred_fallthru
          _
      $region12: #{batched_cross_entropy.1} parent=5 // pred_fallthru
        _
      %p136 = scmp.lt.s32.totalorder %s11, 3
      // Predicated region
      $region17: #{batched_cross_entropy.1} parent=5 // pred_check
        %p137 = pneg %p136
      $region18: #{batched_cross_entropy.1} parent=5 // pred_check_branch
        %139 = sbr.rel (%p137) target = $region20
      $region19: #{batched_cross_entropy.1} parent=5 // pred_region
        // Predicated region
        $region21: #{batched_cross_entropy.1} parent=19 // pred_check
          %p140 = pneg %p54
        $region22: #{batched_cross_entropy.1} parent=19 // pred_check_branch
          %142 = sbr.rel (%p140) target = $region24
        $region23: #{batched_cross_entropy.1} parent=19 // pred_region
          %s143 = sand.u32 %s44, 1
          %s144 = scalar_lea.sflag [#allocation6], %s143
          %s145 = sand.u32 %s44, 1
          %s146 = smul.addr %s145, 8
          %s147 = scalar_lea.vmem [#allocation5], %s146
          %s149 = ssub.s32 128, 128
          %150 = vsyncadd %s144, %s149
          %s151 = sadd.s32 %s20, %s19
          %s152 = sadd.s32 %s151, %s18
          %s153 = smul.addr %s152, 128
          %s154 = scalar_lea.hbm %s0, %s153
          %s156 = sshll.u32 %s147, 4
          %s157 = int_to_ptr.vmem [resolvable:$true] %s156
          %159 = dma.hbm_to_vmem [thread:$0]  %s154, 128, %s157, %s144
        $region24: #{batched_cross_entropy.1} parent=19 // pred_fallthru
          _
      $region20: #{batched_cross_entropy.1} parent=5 // pred_fallthru
        _
      %p160 = scmp.le.s32.totalorder 1, %s11
      %p161 = scmp.lt.s32.totalorder %s11, 4
      %p162 = pnand %p160, %p161
      %p163 = pneg %p162
      // Predicated region
      $region25: #{batched_cross_entropy.1} parent=5 // pred_check
        _
      $region26: #{batched_cross_entropy.1} parent=5 // pred_check_branch
        %165 = sbr.rel (%p162) target = $region28
      $region27: #{batched_cross_entropy.1} parent=5 // pred_region
        %s166 = ssub.s32 %s11, 1
        %s167 = sand.u32 %s47, 1
        %s168 = scalar_lea.sflag [#allocation6], %s167
        %s169 = sand.u32 %s47, 1
        %s170 = smul.addr %s169, 8
        %s171 = scalar_lea.vmem [#allocation5], %s170
        // Predicated region
        $region29: #{batched_cross_entropy.1} parent=27 // pred_check
          %p172 = pneg %p60
        $region30: #{batched_cross_entropy.1} parent=27 // pred_check_branch
          %174 = sbr.rel (%p172) target = $region32
        $region31: #{batched_cross_entropy.1} parent=27 // pred_region
          %175 = dma.done %s168, 128
        $region32: #{batched_cross_entropy.1} parent=27 // pred_fallthru
          _
        %s176 = sand.u32 %s47, 1
        %s177 = scalar_lea.sflag [#allocation6], %s176
        %s178 = sand.u32 %s47, 1
        %s179 = smul.addr %s178, 8
        %s180 = scalar_lea.vmem [#allocation5], %s179
        %p181 = pneg %p60
        %p182 = pneg %p57
        %p183 = scmp.lt.s32.totalorder %s22, 0
        %s184 = scalar_select %p183, %s22, 0
        %s185 = smul.addr %s184, 8
        %s186 = scalar_lea.vmem %s1, %s185
        %p187 = pneg %p86
        %p188 = pneg %p83
        %p189 = pneg %p114
        %p190 = pneg %p111
        %p191 = scmp.lt.s32.totalorder %s21, 2
        %s192 = scalar_select %p191, %s21, 2
        %p193 = scmp.lt.s32.totalorder %s22, 0
        %s194 = scalar_select %p193, %s22, 0
        %s195 = sadd.s32 %s194, %s192
        %s196 = smul.addr %s195, 8
        %s197 = scalar_lea.vmem %s2, %s196
        %p198 = scmp.lt.s32.totalorder %s22, 0
        %s199 = scalar_select %p198, %s22, 0
        %s200 = smul.addr %s199, 8
        %s201 = scalar_lea.vmem %s1, %s200
        %p202 = scmp.lt.s32.totalorder %s21, 2
        %s203 = scalar_select %p202, %s21, 2
        %p204 = scmp.lt.s32.totalorder %s22, 0
        %s205 = scalar_select %p204, %s22, 0
        %s206 = sadd.s32 %s205, %s203
        %s207 = smul.addr %s206, 8
        %s208 = scalar_lea.vmem %s2, %s207
        %p209 = scmp.eq.s32.totalorder %s23, 0
        // Predicated region
        $region33: #{batched_cross_entropy.1} parent=27 // pred_check
          %p210 = pneg %p209
        $region34: #{batched_cross_entropy.1} parent=27 // pred_check_branch
          %212 = sbr.rel (%p210) target = $region36
        $region35: #{batched_cross_entropy.1} parent=27 // pred_region
          %vm213 = vcmask 7168
          %214 = vst.msk [vmem:[#allocation2] sm:$0xff] %vm213, -inf
          %215 = vst.msk [vmem:[#allocation3] sm:$0xff] %vm213, 0.0
          %216 = vst.msk [vmem:[#allocation4] sm:$0xff] %vm213, 0.0
        $region36: #{batched_cross_entropy.1} parent=27 // pred_fallthru
          _
        %v217 = vld [vmem:[%s171] sm:$0xff]
        %v218 = vld [vmem:[%s201] sm:$0xff]
        %v219 = vlaneseq
        %v220 = vand.u32 %v219, 127
        %s221 = smul.u32 %s23, 32
        %v222 = vstv %s221
        %v223 = vadd.s32 %v220, %v222
        %224 = vset.pattern.permute.xlu0 0
        %225 = vperm.xlu0 %224, %v218
        %v226 = vpop.permute.xlu0 %225
        %vm227 = vcmp.eq.s32.totalorder %v223, %v226
        %v228 = vsel %vm227, %v217, 0.0
        %v229 = vld [vmem:[#allocation4] sm:$0xff]
        %vm230 = vcmask 261120
        %v231 = vsel %vm230, %v228, 0.0
        %232 = vadd.xlane.f32.xlu0 %v231
        %v233 = vpop.xlane.xlu0 %232
        %v234 = vadd.f32 %v229, %v233
        %vm235 = vcmask 7168
        %236 = vst.msk [vmem:[#allocation4] sm:$0xff] %vm235, %v234
        %v237 = vsel %vm230, %v217, -inf
        %238 = vmax.xlane.f32.xlu0 %v237
        %v239 = vpop.xlane.xlu0 %238
        %v240 = vld [vmem:[#allocation2] sm:$0xff]
        %v241 = vmax.f32 %v240, %v239
        %243 = vset.pattern.permute.xlu0 0
        %244 = vperm.xlu0 %243, %v241
        %v245 = vpop.permute.xlu0 %244
        %v247 = vsub.f32 %v217, %v245
        %v248 = vmul.f32 %v247, 1.442695
        %v249 = vpow.pop %v248
        %v250 = vld [vmem:[#allocation3] sm:$0xff]
        %v251 = vsub.f32 %v240, %v241
        %v252 = vmul.f32 %v251, 1.442695
        %v253 = vpow.pop %v252
        %v254 = vmul.f32 %v250, %v253
        %v255 = vsel %vm230, %v249, 0.0
        %256 = vadd.xlane.f32.xlu0 %v255
        %v257 = vpop.xlane.xlu0 %256
        %v258 = vadd.f32 %v254, %v257
        %259 = vst.msk [vmem:[#allocation3] sm:$0xff] %vm235, %v258
        %260 = vst.msk [vmem:[#allocation2] sm:$0xff] %vm235, %v241
        // Predicated region
        $region37: #{batched_cross_entropy.1} parent=27 // pred_check
          %p261 = pneg %p209
        $region38: #{batched_cross_entropy.1} parent=27 // pred_check_branch
          %263 = sbr.rel (%p261) target = $region40
        $region39: #{batched_cross_entropy.1} parent=27 // pred_region
          %v264 = vld [vmem:[#allocation2] sm:$0xff]
          %v265 = vld [vmem:[#allocation3] sm:$0xff]
          %v266 = vlog2.pop %v265
          %v267 = vmul.f32 %v266, 0.6931472
          %v268 = vadd.f32 %v264, %v267
          %v269 = vld [vmem:[#allocation4] sm:$0xff]
          %v270 = vsub.f32 %v268, %v269
          %271 = vst.msk [vmem:[%s208] sm:$0xff] %vm235, %v270
        $region40: #{batched_cross_entropy.1} parent=27 // pred_fallthru
          _
        %p272 = scmp.lt.s32.totalorder %s21, 2
        %s273 = scalar_select %p272, %s21, 2
        %p274 = scmp.lt.s32.totalorder %s22, 0
        %s275 = scalar_select %p274, %s22, 0
        %s276 = sadd.s32 %s275, %s273
        %s277 = smul.addr %s276, 8
        %s278 = scalar_lea.vmem %s2, %s277
        // Predicated region
        $region41: #{batched_cross_entropy.1} parent=27 // pred_check
          %p279 = pneg %p111
        $region42: #{batched_cross_entropy.1} parent=27 // pred_check_branch
          %281 = sbr.rel (%p279) target = $region44
        $region43: #{batched_cross_entropy.1} parent=27 // pred_region
          _
        $region44: #{batched_cross_entropy.1} parent=27 // pred_fallthru
          _
      $region28: #{batched_cross_entropy.1} parent=5 // pred_fallthru
        _
      %p282 = scmp.le.s32.totalorder 2, %s11
      // Predicated region
      $region45: #{batched_cross_entropy.1} parent=5 // pred_check
        %p283 = pneg %p282
      $region46: #{batched_cross_entropy.1} parent=5 // pred_check_branch
        %285 = sbr.rel (%p283) target = $region48
      $region47: #{batched_cross_entropy.1} parent=5 // pred_region
        %s286 = ssub.s32 %s11, 2
        // Predicated region
        $region49: #{batched_cross_entropy.1} parent=47 // pred_check
          %p287 = pneg %p117
        $region50: #{batched_cross_entropy.1} parent=47 // pred_check_branch
          %289 = sbr.rel (%p287) target = $region52
        $region51: #{batched_cross_entropy.1} parent=47 // pred_region
          %p290 = scmp.lt.s32.totalorder %s24, 2
          %s291 = scalar_select %p290, %s24, 2
          %p292 = scmp.lt.s32.totalorder %s25, 0
          %s293 = scalar_select %p292, %s25, 0
          %s294 = sadd.s32 %s293, %s291
          %s295 = smul.addr %s294, 8
          %s296 = scalar_lea.vmem %s2, %s295
        $region52: #{batched_cross_entropy.1} parent=47 // pred_fallthru
          _
      $region48: #{batched_cross_entropy.1} parent=5 // pred_fallthru
        _
    $region6: #{batched_cross_entropy.1} parent=1 // loop_footer
      %s15 = sadd.s32 1, %s11
    $region7: #{batched_cross_entropy.1} parent=1 // loop_footer_branch
      %10 = sbr.rel target = $region3
    $region8: #{batched_cross_entropy.1} parent=1 // loop_exit
      _
    %297 = vsyncpa [#allocation6], 1
    %s298 = scalar_lea.sflag [#allocation6], 1
    %299 = vsyncpa %s298, 1

</llo_original>
